<compile_context>
chip_gen: v5e
topology: v5e:2x2
jax: 0.10.0
libtpu: 0.0.40
codegen_flags: <defaults>
</compile_context>

<pallas_src>
import math
import functools

import numpy as np
import jax
import jax.numpy as jnp
from jax.experimental import pallas as pl
from jax.experimental.pallas import tpu as pltpu


def _round_up(x, m):
    return ((x + m - 1) // m) * m


def _build_constants(params, *, num_heads, out_dim):
    """Folded projection+expansion weights and the 0/1 helper matrices.

    Lane index b = (i*H + j)*D + d  (query head i, key head j, feature d),
    padded up to HHDp = round_up(H*H*D, 128) lanes (pad lanes are all-zero).

      W_exp (in_dim, 3*HHDp): x @ W_exp -> [scale*Q_i,d | K_j,d | V_j,d] per lane b
      S     (HHDp, HH) : segment-sum over d              -> scores[n, i*H+j]
      ROT   (n_rot,HH,HH): within-group lane rotations (log-step group max)
      EP    (HH, HHDp) : broadcast e[n, i*H+j] across its D lanes
      T     (HHDp, HD) : sum over j into output column i*D+d
      BD    (HH, HD)   : per-output-column softmax denominator
    """
    H, D = num_heads, out_dim
    HD, HH, HHD = H * D, H * H, H * H * D
    HHDp = _round_up(HHD, 128)
    scale = 1.0 / math.sqrt(D)

    b = np.arange(HHD)
    d = b % D
    p = b // D
    i = p // H
    j = p % H

    wq, bq, wk, bk, wv, bv = [np.asarray(a, np.float32) for a in params]

    def expand(w, cols, s=1.0):
        out = np.zeros((w.shape[0], HHDp), np.float32)
        out[:, :HHD] = s * w[:, cols]          # exact column gather (no matmul)
        return out

    q_cols = i * D + d
    kv_cols = j * D + d
    w_exp = np.concatenate([expand(wq, q_cols, scale), expand(wk, kv_cols),
                            expand(wv, kv_cols)], axis=1)           # (in_dim, 3*HHDp)
    b_exp = np.concatenate([expand(bq, q_cols, scale), expand(bk, kv_cols),
                            expand(bv, kv_cols)], axis=1)           # (1, 3*HHDp)

    S = np.zeros((HHDp, HH), np.float32); S[b, p] = 1.0
    EP = np.zeros((HH, HHDp), np.float32); EP[p, b] = 1.0
    T = np.zeros((HHDp, HD), np.float32); T[b, i * D + d] = 1.0
    BD = np.zeros((HH, HD), np.float32)
    for qi in range(H):
        BD[qi * H:(qi + 1) * H, qi * D:(qi + 1) * D] = 1.0

    # Within-group cyclic rotations by 1, 2, 4, ... : log-step group max.
    n_rot = int(math.ceil(math.log2(max(H, 2))))
    ROT = np.zeros((n_rot, HH, HH), np.float32)
    for k in range(n_rot):
        shift = 1 << k
        for qi in range(H):
            for kj in range(H):
                lane = qi * H + kj
                src = qi * H + ((kj + shift) % H)
                ROT[k, src, lane] = 1.0

    cdt = jnp.bfloat16   # 0/1 entries are exact in bf16 -> half the constant DMA/VMEM
    return (jnp.asarray(w_exp), jnp.asarray(b_exp), jnp.asarray(ROT, cdt),
            jnp.asarray(S, cdt), jnp.asarray(EP, cdt), jnp.asarray(T, cdt),
            jnp.asarray(BD, cdt))


def mha_kernel(x_ref, w_ref, b_ref, rot_ref, s_ref, ep_ref, t_ref, bd_ref, o_ref,
               *, hhdp, n_rot):
    f32 = jnp.float32
    x = x_ref[...]                                                   # (tn, in_dim)

    # Fused projection + lane expansion: ONE MXU matmul (K = in_dim) + bias.
    qkv = jnp.dot(x, w_ref[...], preferred_element_type=f32) + b_ref[...]
    qe = qkv[:, :hhdp]                 # 128-aligned slices: free
    ke = qkv[:, hhdp:2 * hhdp]
    ve = qkv[:, 2 * hhdp:]

    # scores[n, i*H+j] = <Q_i, K_j> / sqrt(D) (scale folded into W_exp);
    # the sum over d is a segment-sum matmul on the MXU.
    s = jnp.dot(qe * ke, s_ref[...].astype(f32), preferred_element_type=f32)

    # Per-query-head (per-group) max via log-step within-group rotation matmuls
    # + elementwise max: exact stabilizer matching the reference softmax,
    # no cross-head underflow risk.  Stays on MXU/VPU (no reshapes).
    m = s
    for k in range(n_rot):
        m = jnp.maximum(m, jnp.dot(m, rot_ref[k].astype(f32),
                                   preferred_element_type=f32))
    e = jnp.exp(s - m)                                               # (tn, H*H)

    # numerator_{i,d} = sum_j e_{ij} V_{j,d}; denominator_{i,d} = sum_j e_{ij}
    num = jnp.dot(jnp.dot(e, ep_ref[...].astype(f32), preferred_element_type=f32) * ve,
                  t_ref[...].astype(f32), preferred_element_type=f32)   # (tn, HD)
    den = jnp.dot(e, bd_ref[...].astype(f32), preferred_element_type=f32)  # (tn, HD)

    inv = pl.reciprocal(den, approx=True)        # EUP slot
    inv = inv * (2.0 - den * inv)                # one Newton step -> ~exact f32

    o_ref[...] = (num * inv).astype(o_ref.dtype)  # exact-width (tn, HD) store


def multi_head_attention(h, params, *, num_heads, out_dim, tile_n=1024):
    """h: (N, in_dim) f32. Returns (N, num_heads*out_dim) f32. (graph `g` unused.)"""
    N, in_dim = h.shape
    H, D = num_heads, out_dim
    HD, HH = H * D, H * H
    HHDp = _round_up(H * H * D, 128)

    consts = _build_constants(params, num_heads=num_heads, out_dim=out_dim)
    w_exp, b_exp, ROT, S, EP, T, BD = consts
    n_rot = ROT.shape[0]
    const_bytes = sum(int(a.size) * a.dtype.itemsize for a in consts)

    # Row tile: as large as the VMEM budget allows (amortizes ~0.35us/step);
    # make sure big N still yields >=2 grid steps so v7x megacore has work.
    tn = min(tile_n, _round_up(N, 8))
    if N >= 2048 and _round_up(N, tn) // tn < 2:
        tn = _round_up((N + 1) // 2, 8)

    def vmem_est(t):
        return (2 * t * (in_dim + HD) * 4        # double-buffered x / out tiles
                + const_bytes                    # single-buffered constants
                + 5 * t * 3 * HHDp * 4)          # generous f32 temporaries
    while vmem_est(tn) > 40 * 2**20 and tn > 64:
        tn = max(64, _round_up(tn // 2, 8))
    vmem_limit = int(min(max(2 * vmem_est(tn), 32 * 2**20), 48 * 2**20))

    n_pad = _round_up(N, tn)
    hp = jnp.pad(h, ((0, n_pad - N), (0, 0))) if n_pad != N else h

    def const_spec(shape):
        zero = (0,) * len(shape)
        # Grid-invariant operand: single buffer (no pointless double-buffering).
        return pl.BlockSpec(shape, lambda *_: zero, pipeline_mode=pl.Buffered(1))

    kernel = functools.partial(mha_kernel, hhdp=HHDp, n_rot=n_rot)

    out = pl.pallas_call(
        kernel,
        out_shape=jax.ShapeDtypeStruct((n_pad, HD), h.dtype),
        grid_spec=pltpu.PrefetchScalarGridSpec(
            num_scalar_prefetch=0,
            grid=(n_pad // tn,),
            in_specs=[
                pl.BlockSpec((tn, in_dim), lambda i: (i, 0)),   # h tile (pipelined)
                const_spec((in_dim, 3 * HHDp)),                 # folded W_exp
                const_spec((1, 3 * HHDp)),                      # folded b_exp
                const_spec((n_rot, HH, HH)),                    # ROT
                const_spec((HHDp, HH)),                         # S
                const_spec((HH, HHDp)),                         # EP
                const_spec((HHDp, HD)),                         # T
                const_spec((HH, HD)),                           # BD
            ],
            out_specs=pl.BlockSpec((tn, HD), lambda i: (i, 0)),
        ),
        compiler_params=pltpu.CompilerParams(
            dimension_semantics=("parallel",),
            vmem_limit_bytes=vmem_limit,
        ),
    )(hp, w_exp, b_exp, ROT, S, EP, T, BD)

    return out if n_pad == N else out[:N]


def reference(h, params, *, num_heads, out_dim):
    """Pure-JAX mirror of the PyTorch forward, for a correctness check."""
    wq, bq, wk, bk, wv, bv = params
    N = h.shape[0]
    H, D = num_heads, out_dim
    Q = (h @ wq + bq).reshape(N, H, D)
    K = (h @ wk + bk).reshape(N, H, D)
    V = (h @ wv + bv).reshape(N, H, D)
    scores = jnp.einsum("nhd,ngd->nhg", Q, K) / math.sqrt(D)
    probs = jax.nn.softmax(scores, axis=-1)
    out = jnp.einsum("nhg,ngd->nhd", probs, V)
    return out.reshape(N, H * D)


def init_params(key, in_dim, out_dim, num_heads, use_bias=True):
    """Deterministic synthetic params. PyTorch Linear stores W as (out, in);
    we keep the transposed (in, out) form for the kernel's h @ W convention."""
    HD = out_dim * num_heads
    keys = jax.random.split(key, 6)
    bound = 1.0 / math.sqrt(in_dim)

    def w(k):
        wt = jax.random.uniform(k, (HD, in_dim), jnp.float32, -bound, bound)
        return wt.T  # (in_dim, HD)

    def b(k):
        if use_bias:
            return jax.random.uniform(k, (1, HD), jnp.float32, -bound, bound)
        return jnp.zeros((1, HD), jnp.float32)

    return (w(keys[0]), b(keys[1]), w(keys[2]), b(keys[3]), w(keys[4]), b(keys[5]))


if __name__ == "__main__":
    # Small shapes: N=16 nodes, in_dim=32, out_dim=8, num_heads=4, use_bias=True.
    N, in_dim, out_dim, num_heads = 16, 32, 8, 4

    key = jax.random.PRNGKey(0)
    k_h, k_p = jax.random.split(key)
    h = jax.random.normal(k_h, (N, in_dim), jnp.float32)
    params = init_params(k_p, in_dim, out_dim, num_heads, use_bias=True)

    out = multi_head_attention(h, params, num_heads=num_heads, out_dim=out_dim)
    out = jax.block_until_ready(out)

    ref = reference(h, params, num_heads=num_heads, out_dim=out_dim)
    assert out.shape == (N, num_heads * out_dim)
    assert jnp.allclose(out, ref, atol=2e-4, rtol=2e-4), "mismatch vs reference"

    print("KERNEL_OK")
</pallas_src>

<mosaic_0001>
module attributes {stable_mosaic.version = 11 : i64} {
  func.func @mha_kernel(%arg0: i32, %arg1: memref<16x32xf32, #tpu.memory_space<vmem>>, %arg2: memref<32x384xf32, #tpu.memory_space<vmem>>, %arg3: memref<1x384xf32, #tpu.memory_space<vmem>>, %arg4: memref<2x16x16xbf16, #tpu.memory_space<vmem>>, %arg5: memref<128x16xbf16, #tpu.memory_space<vmem>>, %arg6: memref<16x128xbf16, #tpu.memory_space<vmem>>, %arg7: memref<128x32xbf16, #tpu.memory_space<vmem>>, %arg8: memref<16x32xbf16, #tpu.memory_space<vmem>>, %arg9: memref<16x32xf32, #tpu.memory_space<vmem>>) attributes {dimension_semantics = [#tpu.dimension_semantics<parallel>], iteration_bounds = array<i64: 1>, scalar_prefetch = 0 : i64, scratch_operands = 0 : i64, tpu.core_type = #tpu.core_type<tc>, window_params = [{transform_indices = @transform_0, window_bounds = array<i64: 16, 32>}, {pipeline_mode = #tpu.pipeline_mode<synchronous>, transform_indices = @transform_1, window_bounds = array<i64: 32, 384>}, {pipeline_mode = #tpu.pipeline_mode<synchronous>, transform_indices = @transform_2, window_bounds = array<i64: 1, 384>}, {pipeline_mode = #tpu.pipeline_mode<synchronous>, transform_indices = @transform_3, window_bounds = array<i64: 2, 16, 16>}, {pipeline_mode = #tpu.pipeline_mode<synchronous>, transform_indices = @transform_4, window_bounds = array<i64: 128, 16>}, {pipeline_mode = #tpu.pipeline_mode<synchronous>, transform_indices = @transform_5, window_bounds = array<i64: 16, 128>}, {pipeline_mode = #tpu.pipeline_mode<synchronous>, transform_indices = @transform_6, window_bounds = array<i64: 128, 32>}, {pipeline_mode = #tpu.pipeline_mode<synchronous>, transform_indices = @transform_7, window_bounds = array<i64: 16, 32>}, {transform_indices = @transform_8, window_bounds = array<i64: 16, 32>}]} {
    %c0 = arith.constant 0 : index
    %c0_0 = arith.constant 0 : index
    %0 = vector.load %arg1[%c0, %c0_0] : memref<16x32xf32, #tpu.memory_space<vmem>>, vector<16x32xf32>
    %c0_1 = arith.constant 0 : index
    %c0_2 = arith.constant 0 : index
    %1 = vector.load %arg2[%c0_1, %c0_2] : memref<32x384xf32, #tpu.memory_space<vmem>>, vector<32x384xf32>
    %cst = arith.constant dense<0.000000e+00> : vector<16x384xf32>
    %2 = tpu.matmul %0, %1, %cst {dimension_numbers = #tpu.dot_dimension_numbers<[1], [0], [0], [1], [0, 0, 1, 1], [], []>} : vector<16x32xf32>, vector<32x384xf32>, vector<16x384xf32> -> vector<16x384xf32>
    %c0_3 = arith.constant 0 : index
    %c0_4 = arith.constant 0 : index
    %3 = vector.load %arg3[%c0_3, %c0_4] : memref<1x384xf32, #tpu.memory_space<vmem>>, vector<1x384xf32>
    %4 = vector.broadcast %3 : vector<1x384xf32> to vector<16x384xf32>
    %5 = arith.addf %2, %4 : vector<16x384xf32>
    %6 = vector.extract_strided_slice %5 {offsets = [0, 0], sizes = [16, 128], strides = [1, 1]} : vector<16x384xf32> to vector<16x128xf32>
    %7 = vector.extract_strided_slice %5 {offsets = [0, 128], sizes = [16, 128], strides = [1, 1]} : vector<16x384xf32> to vector<16x128xf32>
    %8 = vector.extract_strided_slice %5 {offsets = [0, 256], sizes = [16, 128], strides = [1, 1]} : vector<16x384xf32> to vector<16x128xf32>
    %9 = arith.mulf %6, %7 : vector<16x128xf32>
    %c0_5 = arith.constant 0 : index
    %c0_6 = arith.constant 0 : index
    %10 = vector.load %arg5[%c0_5, %c0_6] : memref<128x16xbf16, #tpu.memory_space<vmem>>, vector<128x16xbf16>
    %11 = arith.extf %10 : vector<128x16xbf16> to vector<128x16xf32>
    %cst_7 = arith.constant dense<0.000000e+00> : vector<16x16xf32>
    %12 = tpu.matmul %9, %11, %cst_7 {dimension_numbers = #tpu.dot_dimension_numbers<[1], [0], [0], [1], [0, 0, 1, 1], [], []>} : vector<16x128xf32>, vector<128x16xf32>, vector<16x16xf32> -> vector<16x16xf32>
    %c0_8 = arith.constant 0 : index
    %c0_9 = arith.constant 0 : index
    %c0_10 = arith.constant 0 : index
    %13 = vector.load %arg4[%c0_8, %c0_9, %c0_10] : memref<2x16x16xbf16, #tpu.memory_space<vmem>>, vector<1x16x16xbf16>
    %14 = vector.shape_cast %13 : vector<1x16x16xbf16> to vector<16x16xbf16>
    %15 = arith.extf %14 : vector<16x16xbf16> to vector<16x16xf32>
    %cst_11 = arith.constant dense<0.000000e+00> : vector<16x16xf32>
    %16 = tpu.matmul %12, %15, %cst_11 {dimension_numbers = #tpu.dot_dimension_numbers<[1], [0], [0], [1], [0, 0, 1, 1], [], []>} : vector<16x16xf32>, vector<16x16xf32>, vector<16x16xf32> -> vector<16x16xf32>
    %17 = arith.maximumf %12, %16 : vector<16x16xf32>
    %c1 = arith.constant 1 : index
    %c0_12 = arith.constant 0 : index
    %c0_13 = arith.constant 0 : index
    %18 = vector.load %arg4[%c1, %c0_12, %c0_13] : memref<2x16x16xbf16, #tpu.memory_space<vmem>>, vector<1x16x16xbf16>
    %19 = vector.shape_cast %18 : vector<1x16x16xbf16> to vector<16x16xbf16>
    %20 = arith.extf %19 : vector<16x16xbf16> to vector<16x16xf32>
    %cst_14 = arith.constant dense<0.000000e+00> : vector<16x16xf32>
    %21 = tpu.matmul %17, %20, %cst_14 {dimension_numbers = #tpu.dot_dimension_numbers<[1], [0], [0], [1], [0, 0, 1, 1], [], []>} : vector<16x16xf32>, vector<16x16xf32>, vector<16x16xf32> -> vector<16x16xf32>
    %22 = arith.maximumf %17, %21 : vector<16x16xf32>
    %23 = arith.subf %12, %22 : vector<16x16xf32>
    %24 = math.exp %23 : vector<16x16xf32>
    %c0_15 = arith.constant 0 : index
    %c0_16 = arith.constant 0 : index
    %25 = vector.load %arg6[%c0_15, %c0_16] : memref<16x128xbf16, #tpu.memory_space<vmem>>, vector<16x128xbf16>
    %26 = arith.extf %25 : vector<16x128xbf16> to vector<16x128xf32>
    %cst_17 = arith.constant dense<0.000000e+00> : vector<16x128xf32>
    %27 = tpu.matmul %24, %26, %cst_17 {dimension_numbers = #tpu.dot_dimension_numbers<[1], [0], [0], [1], [0, 0, 1, 1], [], []>} : vector<16x16xf32>, vector<16x128xf32>, vector<16x128xf32> -> vector<16x128xf32>
    %28 = arith.mulf %27, %8 : vector<16x128xf32>
    %c0_18 = arith.constant 0 : index
    %c0_19 = arith.constant 0 : index
    %29 = vector.load %arg7[%c0_18, %c0_19] : memref<128x32xbf16, #tpu.memory_space<vmem>>, vector<128x32xbf16>
    %30 = arith.extf %29 : vector<128x32xbf16> to vector<128x32xf32>
    %cst_20 = arith.constant dense<0.000000e+00> : vector<16x32xf32>
    %31 = tpu.matmul %28, %30, %cst_20 {dimension_numbers = #tpu.dot_dimension_numbers<[1], [0], [0], [1], [0, 0, 1, 1], [], []>} : vector<16x128xf32>, vector<128x32xf32>, vector<16x32xf32> -> vector<16x32xf32>
    %c0_21 = arith.constant 0 : index
    %c0_22 = arith.constant 0 : index
    %32 = vector.load %arg8[%c0_21, %c0_22] : memref<16x32xbf16, #tpu.memory_space<vmem>>, vector<16x32xbf16>
    %33 = arith.extf %32 : vector<16x32xbf16> to vector<16x32xf32>
    %cst_23 = arith.constant dense<0.000000e+00> : vector<16x32xf32>
    %34 = tpu.matmul %24, %33, %cst_23 {dimension_numbers = #tpu.dot_dimension_numbers<[1], [0], [0], [1], [0, 0, 1, 1], [], []>} : vector<16x16xf32>, vector<16x32xf32>, vector<16x32xf32> -> vector<16x32xf32>
    %35 = tpu.reciprocal %34 {approx = true} : vector<16x32xf32> -> vector<16x32xf32>
    %36 = arith.mulf %34, %35 : vector<16x32xf32>
    %cst_24 = arith.constant 2.000000e+00 : f32
    %37 = vector.broadcast %cst_24 : f32 to vector<16x32xf32>
    %38 = arith.subf %37, %36 : vector<16x32xf32>
    %39 = arith.mulf %35, %38 : vector<16x32xf32>
    %40 = arith.mulf %31, %39 : vector<16x32xf32>
    %c0_25 = arith.constant 0 : index
    %c0_26 = arith.constant 0 : index
    %41 = vector.load %arg9[%c0_25, %c0_26] : memref<16x32xf32, #tpu.memory_space<vmem>>, vector<16x32xf32>
    tpu.vector_store %arg9[%c0_25, %c0_26], %40 {strides = array<i32>} : memref<16x32xf32, #tpu.memory_space<vmem>>, vector<16x32xf32>,
    return
  }
  func.func @transform_0(%arg0: i32) -> (i32, i32) {
    %c0_i32 = arith.constant 0 : i32
    %c0_i32_0 = arith.constant 0 : i32
    return %arg0, %c0_i32 : i32, i32
  }
  func.func @transform_1(%arg0: i32) -> (i32, i32) {
    %c0_i32 = arith.constant 0 : i32
    %c0_i32_0 = arith.constant 0 : i32
    %c0_i32_1 = arith.constant 0 : i32
    return %c0_i32, %c0_i32_0 : i32, i32
  }
  func.func @transform_2(%arg0: i32) -> (i32, i32) {
    %c0_i32 = arith.constant 0 : i32
    %c0_i32_0 = arith.constant 0 : i32
    %c0_i32_1 = arith.constant 0 : i32
    return %c0_i32, %c0_i32_0 : i32, i32
  }
  func.func @transform_3(%arg0: i32) -> (i32, i32, i32) {
    %c0_i32 = arith.constant 0 : i32
    %c0_i32_0 = arith.constant 0 : i32
    %c0_i32_1 = arith.constant 0 : i32
    %c0_i32_2 = arith.constant 0 : i32
    return %c0_i32, %c0_i32_0, %c0_i32_1 : i32, i32, i32
  }
  func.func @transform_4(%arg0: i32) -> (i32, i32) {
    %c0_i32 = arith.constant 0 : i32
    %c0_i32_0 = arith.constant 0 : i32
    %c0_i32_1 = arith.constant 0 : i32
    return %c0_i32, %c0_i32_0 : i32, i32
  }
  func.func @transform_5(%arg0: i32) -> (i32, i32) {
    %c0_i32 = arith.constant 0 : i32
    %c0_i32_0 = arith.constant 0 : i32
    %c0_i32_1 = arith.constant 0 : i32
    return %c0_i32, %c0_i32_0 : i32, i32
  }
  func.func @transform_6(%arg0: i32) -> (i32, i32) {
    %c0_i32 = arith.constant 0 : i32
    %c0_i32_0 = arith.constant 0 : i32
    %c0_i32_1 = arith.constant 0 : i32
    return %c0_i32, %c0_i32_0 : i32, i32
  }
  func.func @transform_7(%arg0: i32) -> (i32, i32) {
    %c0_i32 = arith.constant 0 : i32
    %c0_i32_0 = arith.constant 0 : i32
    %c0_i32_1 = arith.constant 0 : i32
    return %c0_i32, %c0_i32_0 : i32, i32
  }
  func.func @transform_8(%arg0: i32) -> (i32, i32) {
    %c0_i32 = arith.constant 0 : i32
    %c0_i32_0 = arith.constant 0 : i32
    return %arg0, %c0_i32 : i32, i32
  }
}

</mosaic_0001>

<llo_original>
// kernel: tpu_custom_call.1
$region0: #{tpu_custom_call.1}
  #allocation0 [shape = 'u32[]', space=smem, size = 0x4, offset = 0x4, fixed_abs, tag = 'smem constant byte address 0x4 - core index']
  #allocation1 [shape = 'u32[72,128]{1,0:T(1,128)}', space=vmem, size = 0x9000, scoped, tag = 'internal scratch']
  %s0 = inlined_call_operand.vmem [shape: f32[16,32], index: 0, kind: input, shape index: {}]
  %s1 = inlined_call_operand.vmem [shape: f32[32,384], index: 1, kind: input, shape index: {}]
  %s2 = inlined_call_operand.hbm [shape: f32[1,384], index: 2, kind: input, shape index: {}]
  %s3 = inlined_call_operand.vmem [shape: bf16[2,16,16], index: 3, kind: input, shape index: {}]
  %s4 = inlined_call_operand.vmem [shape: bf16[128,16], index: 4, kind: input, shape index: {}]
  %s5 = inlined_call_operand.vmem [shape: bf16[16,128], index: 5, kind: input, shape index: {}]
  %s6 = inlined_call_operand.vmem [shape: bf16[128,32], index: 6, kind: input, shape index: {}]
  %s7 = inlined_call_operand.hbm [shape: bf16[16,32], index: 7, kind: input, shape index: {}]
  %s8 = inlined_call_operand.hbm [shape: f32[16,32], index: 8, kind: output, shape index: {}]
  %s9 = sld [smem:[#allocation0]]
  $region50: #{tpu_custom_call.1} parent=0
    _
  %s11 = ssub.s32 1, %s9
  %s12 = scalar_select 0, %s11, %s9
  $region1: #{tpu_custom_call.1} parent=0
    #allocation2 [shape = 'u8[1536]{0}', space=vmem, size = 0x800, scoped, tag = 'input window, operand 2, single buffered']
    #allocation3 [shape = 's32[1]{0}', space=sflag, size = 0x4, scoped, tag = 'scoped memory for tpu_custom_call.1']
    #allocation4 [shape = 's32[1]{0}', space=sflag, size = 0x4, scoped, tag = 'scoped memory for tpu_custom_call.1']
    #allocation5 [shape = 'u8[4096]{0}', space=vmem, size = 0x1000, scoped, tag = 'input window, operand 7, single buffered']
    #allocation6 [shape = 's32[1]{0}', space=sflag, size = 0x4, scoped, tag = 'scoped memory for tpu_custom_call.1']
    #allocation7 [shape = 'u8[8192]{0}', space=vmem, size = 0x2000, scoped, tag = 'output window, operand 0, single buffered']
    %13 = vsyncpa [#allocation3], 0
    %14 = vsyncpa [#allocation6], 0
    %15 = vsyncpa [#allocation4], 0
    // Predicated region
    $region2: #{tpu_custom_call.1} parent=1 // pred_check
      _
    $region3: #{tpu_custom_call.1} parent=1 // pred_check_branch
      %17 = sbr.rel (0) target = $region5
    $region4: #{tpu_custom_call.1} parent=1 // pred_region
      _
    $region5: #{tpu_custom_call.1} parent=1 // pred_fallthru
      _
    // Predicated region
    $region6: #{tpu_custom_call.1} parent=1 // pred_check
      _
    $region7: #{tpu_custom_call.1} parent=1 // pred_check_branch
      %19 = sbr.rel (0) target = $region9
    $region8: #{tpu_custom_call.1} parent=1 // pred_region
      _
    $region9: #{tpu_custom_call.1} parent=1 // pred_fallthru
      _
    // Predicated region
    $region10: #{tpu_custom_call.1} parent=1 // pred_check
      _
    $region11: #{tpu_custom_call.1} parent=1 // pred_check_branch
      %21 = sbr.rel (0) target = $region13
    $region12: #{tpu_custom_call.1} parent=1 // pred_region
      %23 = vsyncadd [#allocation3], 0
      %s25 = sshll.u32 %s2, 4
      %s26 = int_to_ptr.hbm [resolvable:$true] %s25
      %s27 = sshll.u32 [#allocation2], 4
      %s28 = int_to_ptr.vmem [resolvable:$true] %s27
      %30 = dma.hbm_to_vmem [thread:$0]  %s26, 48, %s28, [#allocation3]
    $region13: #{tpu_custom_call.1} parent=1 // pred_fallthru
      _
    // Predicated region
    $region14: #{tpu_custom_call.1} parent=1 // pred_check
      _
    $region15: #{tpu_custom_call.1} parent=1 // pred_check_branch
      %32 = sbr.rel (0) target = $region17
    $region16: #{tpu_custom_call.1} parent=1 // pred_region
      _
    $region17: #{tpu_custom_call.1} parent=1 // pred_fallthru
      _
    // Predicated region
    $region18: #{tpu_custom_call.1} parent=1 // pred_check
      _
    $region19: #{tpu_custom_call.1} parent=1 // pred_check_branch
      %34 = sbr.rel (0) target = $region21
    $region20: #{tpu_custom_call.1} parent=1 // pred_region
      _
    $region21: #{tpu_custom_call.1} parent=1 // pred_fallthru
      _
    // Predicated region
    $region22: #{tpu_custom_call.1} parent=1 // pred_check
      _
    $region23: #{tpu_custom_call.1} parent=1 // pred_check_branch
      %36 = sbr.rel (0) target = $region25
    $region24: #{tpu_custom_call.1} parent=1 // pred_region
      _
    $region25: #{tpu_custom_call.1} parent=1 // pred_fallthru
      _
    // Predicated region
    $region26: #{tpu_custom_call.1} parent=1 // pred_check
      _
    $region27: #{tpu_custom_call.1} parent=1 // pred_check_branch
      %38 = sbr.rel (0) target = $region29
    $region28: #{tpu_custom_call.1} parent=1 // pred_region
      _
    $region29: #{tpu_custom_call.1} parent=1 // pred_fallthru
      _
    // Predicated region
    $region30: #{tpu_custom_call.1} parent=1 // pred_check
      _
    $region31: #{tpu_custom_call.1} parent=1 // pred_check_branch
      %40 = sbr.rel (0) target = $region33
    $region32: #{tpu_custom_call.1} parent=1 // pred_region
      %42 = vsyncadd [#allocation6], 0
      %s43 = sshll.u32 %s7, 4
      %s44 = int_to_ptr.hbm [resolvable:$true] %s43
      %s45 = sshll.u32 [#allocation5], 4
      %s46 = int_to_ptr.vmem [resolvable:$true] %s45
      %51 = dma.hbm_to_vmem [thread:$0]  %s44, 128, %s46, [#allocation6], 64, 64, 4
    $region33: #{tpu_custom_call.1} parent=1 // pred_fallthru
      _
    // Predicated region
    $region34: #{tpu_custom_call.1} parent=1 // pred_check
      _
    $region35: #{tpu_custom_call.1} parent=1 // pred_check_branch
      %53 = sbr.rel (0) target = $region37
    $region36: #{tpu_custom_call.1} parent=1 // pred_region
      %55 = dma.done [#allocation3], 48
    $region37: #{tpu_custom_call.1} parent=1 // pred_fallthru
      _
    // Predicated region
    $region38: #{tpu_custom_call.1} parent=1 // pred_check
      _
    $region39: #{tpu_custom_call.1} parent=1 // pred_check_branch
      %57 = sbr.rel (0) target = $region41
    $region40: #{tpu_custom_call.1} parent=1 // pred_region
      %59 = dma.done [#allocation6], 128
    $region41: #{tpu_custom_call.1} parent=1 // pred_fallthru
      _
    %v60 = vld [vmem:[%s0] sm:$0xff]
    %v61 = vld [vmem:[%s0 + $0x8] sm:$0xff]
    %v62 = vld [vmem:[%s1] sm:$0xff]
    %v63 = vld [vmem:[%s1 + $0x8] sm:$0xff]
    %v64 = vld [vmem:[%s1 + $0x10] sm:$0xff]
    %v65 = vld [vmem:[%s1 + $0x18] sm:$0xff]
    %v66 = vld [vmem:[%s1 + $0x20] sm:$0xff]
    %v67 = vld [vmem:[%s1 + $0x28] sm:$0xff]
    %v68 = vld [vmem:[%s1 + $0x30] sm:$0xff]
    %v69 = vld [vmem:[%s1 + $0x38] sm:$0xff]
    %v70 = vld [vmem:[%s1 + $0x40] sm:$0xff]
    %v71 = vld [vmem:[%s1 + $0x48] sm:$0xff]
    %v72 = vld [vmem:[%s1 + $0x50] sm:$0xff]
    %v73 = vld [vmem:[%s1 + $0x58] sm:$0xff]
    %v74 = vld [vmem:[#allocation2] sm:$0x7]
    %v76 = vperm.slane %v74, 0
    %v77 = vperm.slane %v74, 1
    %v78 = vperm.slane %v74, 2
    %vm82 = vcmask 261120
    %v84 = vsel %vm82, %v60, 0
    %v87 = vsel %vm82, %v61, 0
    %89 = vmatpush.msra.mxu0 0.0
    %90 = vmatpush.msra.mxu0 0.0
    %91 = vmatpush.msra.mxu0 0.0
    %92 = vmatpush.msra.mxu0 0.0
    %93 = vmatpush.msra.mxu0 0.0
    %94 = vmatpush.msra.mxu0 0.0
    %95 = vmatpush.msra.mxu0 0.0
    %96 = vmatpush.msra.mxu0 0.0
    %97 = vmatpush.msra.mxu0 0.0
    %98 = vmatpush.msra.mxu0 0.0
    %99 = vmatpush.msra.mxu0 0.0
    %100 = vmatpush.msra.mxu0 0.0
    %101 = vmatpush.msra.mxu0 %v71
    %102 = vmatpush.msra.mxu0 %v68
    %103 = vmatpush.msra.mxu0 %v65
    %104 = vmatpush.msra.mxu0 %v62
    %105 = vmatmul.f32.gmra.mxu0 %v84
    %v106 = vpop.f32.mrf.mxu0
    %v107 = vadd.f32 %v76, %v106
    %108 = vmatmul.f32.gmra.mxu0 %v87
    %v109 = vpop.f32.mrf.mxu0
    %v110 = vadd.f32 %v76, %v109
    %111 = vdwg.mxu0
    %112 = vmatpush.msra.mxu0 0.0
    %113 = vmatpush.msra.mxu0 0.0
    %114 = vmatpush.msra.mxu0 0.0
    %115 = vmatpush.msra.mxu0 0.0
    %116 = vmatpush.msra.mxu0 0.0
    %117 = vmatpush.msra.mxu0 0.0
    %118 = vmatpush.msra.mxu0 0.0
    %119 = vmatpush.msra.mxu0 0.0
    %120 = vmatpush.msra.mxu0 0.0
    %121 = vmatpush.msra.mxu0 0.0
    %122 = vmatpush.msra.mxu0 0.0
    %123 = vmatpush.msra.mxu0 0.0
    %124 = vmatpush.msra.mxu0 %v72
    %125 = vmatpush.msra.mxu0 %v69
    %126 = vmatpush.msra.mxu0 %v66
    %127 = vmatpush.msra.mxu0 %v63
    %128 = vmatmul.f32.gmra.mxu0 %v84
    %v129 = vpop.f32.mrf.mxu0
    %v130 = vadd.f32 %v77, %v129
    %131 = vmatmul.f32.gmra.mxu0 %v87
    %v132 = vpop.f32.mrf.mxu0
    %v133 = vadd.f32 %v77, %v132
    %134 = vdwg.mxu0
    %135 = vmatpush.msra.mxu0 0.0
    %136 = vmatpush.msra.mxu0 0.0
    %137 = vmatpush.msra.mxu0 0.0
    %138 = vmatpush.msra.mxu0 0.0
    %139 = vmatpush.msra.mxu0 0.0
    %140 = vmatpush.msra.mxu0 0.0
    %141 = vmatpush.msra.mxu0 0.0
    %142 = vmatpush.msra.mxu0 0.0
    %143 = vmatpush.msra.mxu0 0.0
    %144 = vmatpush.msra.mxu0 0.0
    %145 = vmatpush.msra.mxu0 0.0
    %146 = vmatpush.msra.mxu0 0.0
    %147 = vmatpush.msra.mxu0 %v73
    %148 = vmatpush.msra.mxu0 %v70
    %149 = vmatpush.msra.mxu0 %v67
    %150 = vmatpush.msra.mxu0 %v64
    %151 = vmatmul.f32.gmra.mxu0 %v84
    %v152 = vpop.f32.mrf.mxu0
    %v153 = vadd.f32 %v78, %v152
    %154 = vmatmul.f32.gmra.mxu0 %v87
    %v155 = vpop.f32.mrf.mxu0
    %v156 = vadd.f32 %v78, %v155
    %157 = vdwg.mxu0
    %v158 = vmul.f32 %v107, %v130
    %v159 = vmul.f32 %v110, %v133
    %v160 = vld [vmem:[%s4] sm:$0xf]
    %v161 = vld [vmem:[%s4 + $0x4] sm:$0xf]
    %v162 = vld [vmem:[%s4 + $0x8] sm:$0xf]
    %v163 = vld [vmem:[%s4 + $0xc] sm:$0xf]
    %v164 = vld [vmem:[%s4 + $0x10] sm:$0xf]
    %v165 = vld [vmem:[%s4 + $0x14] sm:$0xf]
    %v166 = vld [vmem:[%s4 + $0x18] sm:$0xf]
    %v167 = vld [vmem:[%s4 + $0x1c] sm:$0xf]
    %v168 = vld [vmem:[%s4 + $0x20] sm:$0xf]
    %v169 = vld [vmem:[%s4 + $0x24] sm:$0xf]
    %v170 = vld [vmem:[%s4 + $0x28] sm:$0xf]
    %v171 = vld [vmem:[%s4 + $0x2c] sm:$0xf]
    %v172 = vld [vmem:[%s4 + $0x30] sm:$0xf]
    %v173 = vld [vmem:[%s4 + $0x34] sm:$0xf]
    %v174 = vld [vmem:[%s4 + $0x38] sm:$0xf]
    %v175 = vld [vmem:[%s4 + $0x3c] sm:$0xf]
    %v176 = vunpack.c.l.bf16 %v160
    %v177 = vunpack.c.l.bf16 %v161
    %v178 = vunpack.c.l.bf16 %v162
    %v179 = vunpack.c.l.bf16 %v163
    %v180 = vunpack.c.l.bf16 %v164
    %v181 = vunpack.c.l.bf16 %v165
    %v182 = vunpack.c.l.bf16 %v166
    %v183 = vunpack.c.l.bf16 %v167
    %v184 = vunpack.c.l.bf16 %v168
    %v185 = vunpack.c.l.bf16 %v169
    %v186 = vunpack.c.l.bf16 %v170
    %v187 = vunpack.c.l.bf16 %v171
    %v188 = vunpack.c.l.bf16 %v172
    %v189 = vunpack.c.l.bf16 %v173
    %v190 = vunpack.c.l.bf16 %v174
    %v191 = vunpack.c.l.bf16 %v175
    %192 = vmatpush.msra.mxu0 %v191
    %193 = vmatpush.msra.mxu0 %v190
    %194 = vmatpush.msra.mxu0 %v189
    %195 = vmatpush.msra.mxu0 %v188
    %196 = vmatpush.msra.mxu0 %v187
    %197 = vmatpush.msra.mxu0 %v186
    %198 = vmatpush.msra.mxu0 %v185
    %199 = vmatpush.msra.mxu0 %v184
    %200 = vmatpush.msra.mxu0 %v183
    %201 = vmatpush.msra.mxu0 %v182
    %202 = vmatpush.msra.mxu0 %v181
    %203 = vmatpush.msra.mxu0 %v180
    %204 = vmatpush.msra.mxu0 %v179
    %205 = vmatpush.msra.mxu0 %v178
    %206 = vmatpush.msra.mxu0 %v177
    %207 = vmatpush.msra.mxu0 %v176
    %208 = vmatmul.f32.gmra.mxu0 %v158
    %v209 = vpop.f32.mrf.mxu0
    %v210 = vadd.f32 0.0, %v209
    %211 = vmatmul.f32.gmra.mxu0 %v159
    %v212 = vpop.f32.mrf.mxu0
    %v213 = vadd.f32 0.0, %v212
    %214 = vdwg.mxu0
    %v215 = vld [vmem:[%s3] sm:$0xf]
    %v216 = vld [vmem:[%s3 + $0x4] sm:$0xf]
    %v217 = vunpack.c.l.bf16 %v215
    %v218 = vunpack.c.l.bf16 %v216
    %vm219 = vcmask 130048
    %v221 = vsel %vm219, %v210, 0
    %v224 = vsel %vm219, %v213, 0
    %226 = vmatpush.msra.mxu0 0.0
    %227 = vmatpush.msra.mxu0 0.0
    %228 = vmatpush.msra.mxu0 0.0
    %229 = vmatpush.msra.mxu0 0.0
    %230 = vmatpush.msra.mxu0 0.0
    %231 = vmatpush.msra.mxu0 0.0
    %232 = vmatpush.msra.mxu0 0.0
    %233 = vmatpush.msra.mxu0 0.0
    %234 = vmatpush.msra.mxu0 0.0
    %235 = vmatpush.msra.mxu0 0.0
    %236 = vmatpush.msra.mxu0 0.0
    %237 = vmatpush.msra.mxu0 0.0
    %238 = vmatpush.msra.mxu0 0.0
    %239 = vmatpush.msra.mxu0 0.0
    %240 = vmatpush.msra.mxu0 %v218
    %241 = vmatpush.msra.mxu0 %v217
    %242 = vmatmul.f32.gmra.mxu0 %v221
    %v243 = vpop.f32.mrf.mxu0
    %v244 = vadd.f32 0.0, %v243
    %245 = vmatmul.f32.gmra.mxu0 %v224
    %v246 = vpop.f32.mrf.mxu0
    %v247 = vadd.f32 0.0, %v246
    %248 = vdwg.mxu0
    %v249 = vmax.f32 %v210, %v244
    %v250 = vmax.f32 %v213, %v247
    %s251 = scalar_lea.vmem %s3, 8
    %v252 = vld [vmem:[%s251] sm:$0xf]
    %v253 = vld [vmem:[%s251 + $0x4] sm:$0xf]
    %v254 = vunpack.c.l.bf16 %v252
    %v255 = vunpack.c.l.bf16 %v253
    %v257 = vsel %vm219, %v249, 0
    %v260 = vsel %vm219, %v250, 0
    %262 = vmatpush.msra.mxu0 0.0
    %263 = vmatpush.msra.mxu0 0.0
    %264 = vmatpush.msra.mxu0 0.0
    %265 = vmatpush.msra.mxu0 0.0
    %266 = vmatpush.msra.mxu0 0.0
    %267 = vmatpush.msra.mxu0 0.0
    %268 = vmatpush.msra.mxu0 0.0
    %269 = vmatpush.msra.mxu0 0.0
    %270 = vmatpush.msra.mxu0 0.0
    %271 = vmatpush.msra.mxu0 0.0
    %272 = vmatpush.msra.mxu0 0.0
    %273 = vmatpush.msra.mxu0 0.0
    %274 = vmatpush.msra.mxu0 0.0
    %275 = vmatpush.msra.mxu0 0.0
    %276 = vmatpush.msra.mxu0 %v255
    %277 = vmatpush.msra.mxu0 %v254
    %278 = vmatmul.f32.gmra.mxu0 %v257
    %v279 = vpop.f32.mrf.mxu0
    %v280 = vadd.f32 0.0, %v279
    %281 = vmatmul.f32.gmra.mxu0 %v260
    %v282 = vpop.f32.mrf.mxu0
    %v283 = vadd.f32 0.0, %v282
    %284 = vdwg.mxu0
    %v285 = vmax.f32 %v249, %v280
    %v286 = vmax.f32 %v250, %v283
    %v287 = vsub.f32 %v210, %v285
    %v288 = vsub.f32 %v213, %v286
    %v289 = vmul.f32 %v287, 1.442695
    %v290 = vpow.pop %v289
    %v291 = vmul.f32 %v288, 1.442695
    %v292 = vpow.pop %v291
    %v293 = vld [vmem:[%s5] sm:$0xf]
    %v294 = vld [vmem:[%s5 + $0x4] sm:$0xf]
    %v295 = vunpack.c.l.bf16 %v293
    %v296 = vunpack.c.l.bf16 %v294
    %v298 = vsel %vm219, %v290, 0
    %v301 = vsel %vm219, %v292, 0
    %303 = vmatpush.msra.mxu0 0.0
    %304 = vmatpush.msra.mxu0 0.0
    %305 = vmatpush.msra.mxu0 0.0
    %306 = vmatpush.msra.mxu0 0.0
    %307 = vmatpush.msra.mxu0 0.0
    %308 = vmatpush.msra.mxu0 0.0
    %309 = vmatpush.msra.mxu0 0.0
    %310 = vmatpush.msra.mxu0 0.0
    %311 = vmatpush.msra.mxu0 0.0
    %312 = vmatpush.msra.mxu0 0.0
    %313 = vmatpush.msra.mxu0 0.0
    %314 = vmatpush.msra.mxu0 0.0
    %315 = vmatpush.msra.mxu0 0.0
    %316 = vmatpush.msra.mxu0 0.0
    %317 = vmatpush.msra.mxu0 %v296
    %318 = vmatpush.msra.mxu0 %v295
    %319 = vmatmul.f32.gmra.mxu0 %v298
    %v320 = vpop.f32.mrf.mxu0
    %v321 = vadd.f32 0.0, %v320
    %322 = vmatmul.f32.gmra.mxu0 %v301
    %v323 = vpop.f32.mrf.mxu0
    %v324 = vadd.f32 0.0, %v323
    %325 = vdwg.mxu0
    %v326 = vmul.f32 %v321, %v153
    %v327 = vmul.f32 %v324, %v156
    %v328 = vld [vmem:[%s6] sm:$0xf]
    %v329 = vld [vmem:[%s6 + $0x4] sm:$0xf]
    %v330 = vld [vmem:[%s6 + $0x8] sm:$0xf]
    %v331 = vld [vmem:[%s6 + $0xc] sm:$0xf]
    %v332 = vld [vmem:[%s6 + $0x10] sm:$0xf]
    %v333 = vld [vmem:[%s6 + $0x14] sm:$0xf]
    %v334 = vld [vmem:[%s6 + $0x18] sm:$0xf]
    %v335 = vld [vmem:[%s6 + $0x1c] sm:$0xf]
    %v336 = vld [vmem:[%s6 + $0x20] sm:$0xf]
    %v337 = vld [vmem:[%s6 + $0x24] sm:$0xf]
    %v338 = vld [vmem:[%s6 + $0x28] sm:$0xf]
    %v339 = vld [vmem:[%s6 + $0x2c] sm:$0xf]
    %v340 = vld [vmem:[%s6 + $0x30] sm:$0xf]
    %v341 = vld [vmem:[%s6 + $0x34] sm:$0xf]
    %v342 = vld [vmem:[%s6 + $0x38] sm:$0xf]
    %v343 = vld [vmem:[%s6 + $0x3c] sm:$0xf]
    %v344 = vunpack.c.l.bf16 %v328
    %v345 = vunpack.c.l.bf16 %v329
    %v346 = vunpack.c.l.bf16 %v330
    %v347 = vunpack.c.l.bf16 %v331
    %v348 = vunpack.c.l.bf16 %v332
    %v349 = vunpack.c.l.bf16 %v333
    %v350 = vunpack.c.l.bf16 %v334
    %v351 = vunpack.c.l.bf16 %v335
    %v352 = vunpack.c.l.bf16 %v336
    %v353 = vunpack.c.l.bf16 %v337
    %v354 = vunpack.c.l.bf16 %v338
    %v355 = vunpack.c.l.bf16 %v339
    %v356 = vunpack.c.l.bf16 %v340
    %v357 = vunpack.c.l.bf16 %v341
    %v358 = vunpack.c.l.bf16 %v342
    %v359 = vunpack.c.l.bf16 %v343
    %360 = vmatpush.msra.mxu0 %v359
    %361 = vmatpush.msra.mxu0 %v358
    %362 = vmatpush.msra.mxu0 %v357
    %363 = vmatpush.msra.mxu0 %v356
    %364 = vmatpush.msra.mxu0 %v355
    %365 = vmatpush.msra.mxu0 %v354
    %366 = vmatpush.msra.mxu0 %v353
    %367 = vmatpush.msra.mxu0 %v352
    %368 = vmatpush.msra.mxu0 %v351
    %369 = vmatpush.msra.mxu0 %v350
    %370 = vmatpush.msra.mxu0 %v349
    %371 = vmatpush.msra.mxu0 %v348
    %372 = vmatpush.msra.mxu0 %v347
    %373 = vmatpush.msra.mxu0 %v346
    %374 = vmatpush.msra.mxu0 %v345
    %375 = vmatpush.msra.mxu0 %v344
    %376 = vmatmul.f32.gmra.mxu0 %v326
    %v377 = vpop.f32.mrf.mxu0
    %v378 = vadd.f32 0.0, %v377
    %379 = vmatmul.f32.gmra.mxu0 %v327
    %v380 = vpop.f32.mrf.mxu0
    %v381 = vadd.f32 0.0, %v380
    %382 = vdwg.mxu0
    %v383 = vld [vmem:[#allocation5] sm:$0xf]
    %v384 = vld [vmem:[#allocation5 + $0x4] sm:$0xf]
    %v385 = vunpack.c.l.bf16 %v383
    %v386 = vunpack.c.l.bf16 %v384
    %387 = vmatpush.msra.mxu0 0.0
    %388 = vmatpush.msra.mxu0 0.0
    %389 = vmatpush.msra.mxu0 0.0
    %390 = vmatpush.msra.mxu0 0.0
    %391 = vmatpush.msra.mxu0 0.0
    %392 = vmatpush.msra.mxu0 0.0
    %393 = vmatpush.msra.mxu0 0.0
    %394 = vmatpush.msra.mxu0 0.0
    %395 = vmatpush.msra.mxu0 0.0
    %396 = vmatpush.msra.mxu0 0.0
    %397 = vmatpush.msra.mxu0 0.0
    %398 = vmatpush.msra.mxu0 0.0
    %399 = vmatpush.msra.mxu0 0.0
    %400 = vmatpush.msra.mxu0 0.0
    %401 = vmatpush.msra.mxu0 %v386
    %402 = vmatpush.msra.mxu0 %v385
    %403 = vmatmul.f32.gmra.mxu0 %v298
    %v404 = vpop.f32.mrf.mxu0
    %v405 = vadd.f32 0.0, %v404
    %406 = vmatmul.f32.gmra.mxu0 %v301
    %v407 = vpop.f32.mrf.mxu0
    %v408 = vadd.f32 0.0, %v407
    %409 = vdwg.mxu0
    %v410 = vrcp.pop %v405
    %v411 = vrcp.pop %v408
    %v412 = vmul.f32 %v405, %v410
    %v413 = vmul.f32 %v408, %v411
    %v414 = vsub.f32 2.0, %v412
    %v415 = vsub.f32 2.0, %v413
    %v416 = vmul.f32 %v410, %v414
    %v417 = vmul.f32 %v411, %v415
    %v418 = vmul.f32 %v378, %v416
    %v419 = vmul.f32 %v381, %v417
    %420 = vst.msk [vmem:[#allocation7] sm:$0xff] %vm82, %v418
    %421 = vst.msk [vmem:[#allocation7 + $0x8] sm:$0xff] %vm82, %v419
    // Predicated region
    $region42: #{tpu_custom_call.1} parent=1 // pred_check
      _
    $region43: #{tpu_custom_call.1} parent=1 // pred_check_branch
      %423 = sbr.rel (0) target = $region45
    $region44: #{tpu_custom_call.1} parent=1 // pred_region
      %425 = vsyncadd [#allocation4], 0
      %s426 = sshll.u32 [#allocation7], 4
      %s427 = int_to_ptr.vmem [resolvable:$true] %s426
      %s428 = sshll.u32 %s8, 4
      %s429 = int_to_ptr.hbm [resolvable:$true] %s428
      %434 = dma.vmem_to_hbm [thread:$0]  %s427, 256, %s429, [#allocation4], 128, 128, 8
    $region45: #{tpu_custom_call.1} parent=1 // pred_fallthru
      _
    // Predicated region
    $region46: #{tpu_custom_call.1} parent=1 // pred_check
      _
    $region47: #{tpu_custom_call.1} parent=1 // pred_check_branch
      %436 = sbr.rel (0) target = $region49
    $region48: #{tpu_custom_call.1} parent=1 // pred_region
      %438 = dma.done [#allocation4], 256
    $region49: #{tpu_custom_call.1} parent=1 // pred_fallthru
      _
    %439 = vsyncpa [#allocation3], 1
    %440 = vsyncpa [#allocation6], 1
    %441 = vsyncpa [#allocation4], 1

</llo_original>
